<compile_context>
chip_gen: v5e
topology: v5e:2x2
jax: 0.10.0
libtpu: 0.0.40
codegen_flags: <defaults>
</compile_context>

<pallas_src>
import jax
import jax.numpy as jnp
from jax.experimental import pallas as pl
from jax.experimental.pallas import tpu as pltpu

LANE = 128  # padded output width so stores are lane-dense


def _round_up(x, m):
    return ((x + m - 1) // m) * m


def mlp_policy_kernel(belief_ref, state_ref,
                      w1b_ref, w1s_ref, b1_ref,
                      w2_ref, b2_ref,
                      w3_ref, b3_ref,
                      w4_ref, b4_ref,
                      o_ref):
    bf16 = jnp.bfloat16
    f32 = jnp.float32

    # Layer 1: split-weight dots replace the lane-axis concat.
    h1 = (jnp.dot(belief_ref[...].astype(bf16), w1b_ref[...], preferred_element_type=f32)
          + jnp.dot(state_ref[...].astype(bf16), w1s_ref[...], preferred_element_type=f32)
          + b1_ref[...])
    h1 = jnp.maximum(h1, 0.0)                                   # ReLU (+ Dropout = identity)

    h2 = jnp.dot(h1.astype(bf16), w2_ref[...], preferred_element_type=f32) + b2_ref[...]
    h2 = jnp.maximum(h2, 0.0)

    h3 = jnp.dot(h2.astype(bf16), w3_ref[...], preferred_element_type=f32) + b3_ref[...]
    h3 = jnp.maximum(h3, 0.0)

    logits = jnp.dot(h3.astype(bf16), w4_ref[...], preferred_element_type=f32) + b4_ref[...]
    # sigmoid(x) - 0.5 == 0.5 * tanh(x / 2): single EUP op, no extra VALU subtract.
    o_ref[...] = 0.5 * jnp.tanh(0.5 * logits)                   # padded lanes sliced off outside


def mlp_policy_forward(belief, state, params, *, max_batch_tile=512):
    """belief: (B, belief_size), state: (B, state_size) -> (B, action_size) float32."""
    (w1, b1), (w2, b2), (w3, b3), (w4, b4) = params
    B, belief_size = belief.shape
    state_size = state.shape[1]
    action_size = w4.shape[1]
    h1d, h2d, h3d = w1.shape[1], w2.shape[1], w3.shape[1]

    # ---- weight prep (all layout plumbing happens outside the kernel) -------
    w1b = w1[:belief_size].astype(jnp.bfloat16)          # rows that multiply `belief`
    w1s = w1[belief_size:].astype(jnp.bfloat16)          # rows that multiply `state`
    out_w = _round_up(max(action_size, 1), LANE)         # lane-dense output head
    w4p = jnp.zeros((w4.shape[0], out_w), jnp.float32).at[:, :action_size].set(w4)
    w4p = w4p.astype(jnp.bfloat16)
    b4p = jnp.zeros((1, out_w), jnp.float32).at[:, :action_size].set(b4)
    w2b, w3b = w2.astype(jnp.bfloat16), w3.astype(jnp.bfloat16)
    b1f, b2f, b3f = b1.astype(jnp.float32), b2.astype(jnp.float32), b3.astype(jnp.float32)

    # ---- batch tiling --------------------------------------------------------
    # Tile of <= 512 rows: amortizes per-step overhead (~0.35 us/step), fits v7x's
    # 64 MiB VMEM with large margin (weights ~0.6 MiB + activations ~1.5 MiB per tile).
    tb = min(max_batch_tile, _round_up(B, 8))
    bp = _round_up(B, tb)
    if bp != B:
        pad = bp - B
        belief = jnp.pad(belief, ((0, pad), (0, 0)))
        state = jnp.pad(state, ((0, pad), (0, 0)))
    grid = (bp // tb,)

    batch_spec = lambda feat: pl.BlockSpec((tb, feat), lambda i: (i, 0))
    resident = lambda arr: pl.BlockSpec(arr.shape, lambda i: (0, 0))  # stays in VMEM across tiles

    flops = 2 * bp * ((belief_size + state_size) * h1d + h1d * h2d + h2d * h3d + h3d * out_w)
    weight_bytes = sum(int(a.size) * a.dtype.itemsize
                       for a in (w1b, w1s, b1f, w2b, b2f, w3b, b3f, w4p, b4p))
    bytes_accessed = int(belief.size) * 4 + int(state.size) * 4 + weight_bytes + bp * out_w * 4

    out = pl.pallas_call(
        mlp_policy_kernel,
        out_shape=jax.ShapeDtypeStruct((bp, out_w), jnp.float32),
        grid=grid,
        in_specs=[
            batch_spec(belief_size), batch_spec(state_size),
            resident(w1b), resident(w1s), resident(b1f),
            resident(w2b), resident(b2f),
            resident(w3b), resident(b3f),
            resident(w4p), resident(b4p),
        ],
        out_specs=pl.BlockSpec((tb, out_w), lambda i: (i, 0)),
        compiler_params=pltpu.CompilerParams(
            dimension_semantics=("parallel",)),    # v7x: shard batch tiles across the 2 TCs
        cost_estimate=pl.CostEstimate(
            flops=flops, transcendentals=bp * out_w, bytes_accessed=bytes_accessed),
    )(belief, state, w1b, w1s, b1f, w2b, b2f, w3b, b3f, w4p, b4p)

    return out[:B, :action_size]


def init_params(key, belief_size, state_size, action_size):
    """Deterministic synthetic params, PyTorch-style init. Weights stored (in, out) = W_pytorch.T."""
    dims = [belief_size + state_size, 512, 128, 32, action_size]
    params = []
    for i in range(4):
        key, kw, kb = jax.random.split(key, 3)
        fan_in, fan_out = dims[i], dims[i + 1]
        bound = 1.0 / jnp.sqrt(fan_in)
        w = jax.random.uniform(kw, (fan_in, fan_out), jnp.float32, -bound, bound)
        b = jax.random.uniform(kb, (1, fan_out), jnp.float32, -bound, bound)
        params.append((w, b))
    return params


def reference_forward(belief, state, params, *, emulate_bf16=False):
    """Pure-JAX reference of MLPPolicy.forward (dropout = identity)."""
    x = jnp.concatenate([belief, state], axis=1)
    for i, (w, b) in enumerate(params):
        lhs, rhs = x, w
        if emulate_bf16:
            lhs, rhs = lhs.astype(jnp.bfloat16), rhs.astype(jnp.bfloat16)
        x = jnp.dot(lhs, rhs, preferred_element_type=jnp.float32) + b
        x = jnp.maximum(x, 0.0) if i < 3 else jax.nn.sigmoid(x)
    return x - 0.5


if __name__ == "__main__":
    key = jax.random.PRNGKey(0)
    belief_size, state_size, action_size = 32, 16, 8
    B = 2

    k1, k2, k3 = jax.random.split(key, 3)
    belief = jax.random.normal(k1, (B, belief_size), jnp.float32)
    state = jax.random.normal(k2, (B, state_size), jnp.float32)
    params = init_params(k3, belief_size, state_size, action_size)

    out = jax.block_until_ready(mlp_policy_forward(belief, state, params))
    assert out.shape == (B, action_size)

    # Tight check vs a reference that uses the same bf16-input / f32-accumulate dots.
    ref_bf16 = reference_forward(belief, state, params, emulate_bf16=True)
    assert jnp.allclose(out, ref_bf16, atol=2e-3, rtol=0), "mismatch vs bf16-emulating reference"

    # Loose semantic check vs the pure-f32 PyTorch-equivalent reference.
    ref_f32 = reference_forward(belief, state, params, emulate_bf16=False)
    assert float(jnp.max(jnp.abs(out - ref_f32))) < 5e-2, "semantics drifted from f32 reference"

    print("KERNEL_OK")
</pallas_src>

<mosaic_0001>
module attributes {stable_mosaic.version = 11 : i64} {
  func.func @mlp_policy_kernel(%arg0: i32, %arg1: memref<8x32xf32, #tpu.memory_space<vmem>>, %arg2: memref<8x16xf32, #tpu.memory_space<vmem>>, %arg3: memref<32x512xbf16, #tpu.memory_space<vmem>>, %arg4: memref<16x512xbf16, #tpu.memory_space<vmem>>, %arg5: memref<1x512xf32, #tpu.memory_space<vmem>>, %arg6: memref<512x128xbf16, #tpu.memory_space<vmem>>, %arg7: memref<1x128xf32, #tpu.memory_space<vmem>>, %arg8: memref<128x32xbf16, #tpu.memory_space<vmem>>, %arg9: memref<1x32xf32, #tpu.memory_space<vmem>>, %arg10: memref<32x128xbf16, #tpu.memory_space<vmem>>, %arg11: memref<1x128xf32, #tpu.memory_space<vmem>>, %arg12: memref<8x128xf32, #tpu.memory_space<vmem>>) attributes {dimension_semantics = [#tpu.dimension_semantics<parallel>], iteration_bounds = array<i64: 1>, scalar_prefetch = 0 : i64, scratch_operands = 0 : i64, tpu.core_type = #tpu.core_type<tc>, window_params = [{transform_indices = @transform_0, window_bounds = array<i64: 8, 32>}, {transform_indices = @transform_1, window_bounds = array<i64: 8, 16>}, {pipeline_mode = #tpu.pipeline_mode<synchronous>, transform_indices = @transform_2, window_bounds = array<i64: 32, 512>}, {pipeline_mode = #tpu.pipeline_mode<synchronous>, transform_indices = @transform_3, window_bounds = array<i64: 16, 512>}, {pipeline_mode = #tpu.pipeline_mode<synchronous>, transform_indices = @transform_4, window_bounds = array<i64: 1, 512>}, {pipeline_mode = #tpu.pipeline_mode<synchronous>, transform_indices = @transform_5, window_bounds = array<i64: 512, 128>}, {pipeline_mode = #tpu.pipeline_mode<synchronous>, transform_indices = @transform_6, window_bounds = array<i64: 1, 128>}, {pipeline_mode = #tpu.pipeline_mode<synchronous>, transform_indices = @transform_7, window_bounds = array<i64: 128, 32>}, {pipeline_mode = #tpu.pipeline_mode<synchronous>, transform_indices = @transform_8, window_bounds = array<i64: 1, 32>}, {pipeline_mode = #tpu.pipeline_mode<synchronous>, transform_indices = @transform_9, window_bounds = array<i64: 32, 128>}, {pipeline_mode = #tpu.pipeline_mode<synchronous>, transform_indices = @transform_10, window_bounds = array<i64: 1, 128>}, {transform_indices = @transform_11, window_bounds = array<i64: 8, 128>}]} {
    %c0 = arith.constant 0 : index
    %c0_0 = arith.constant 0 : index
    %0 = vector.load %arg1[%c0, %c0_0] : memref<8x32xf32, #tpu.memory_space<vmem>>, vector<8x32xf32>
    %1 = arith.truncf %0 : vector<8x32xf32> to vector<8x32xbf16>
    %c0_1 = arith.constant 0 : index
    %c0_2 = arith.constant 0 : index
    %2 = vector.load %arg3[%c0_1, %c0_2] : memref<32x512xbf16, #tpu.memory_space<vmem>>, vector<32x512xbf16>
    %cst = arith.constant dense<0.000000e+00> : vector<8x512xf32>
    %3 = tpu.matmul %1, %2, %cst {dimension_numbers = #tpu.dot_dimension_numbers<[1], [0], [0], [1], [0, 0, 1, 1], [], []>} : vector<8x32xbf16>, vector<32x512xbf16>, vector<8x512xf32> -> vector<8x512xf32>
    %c0_3 = arith.constant 0 : index
    %c0_4 = arith.constant 0 : index
    %4 = vector.load %arg2[%c0_3, %c0_4] : memref<8x16xf32, #tpu.memory_space<vmem>>, vector<8x16xf32>
    %5 = arith.truncf %4 : vector<8x16xf32> to vector<8x16xbf16>
    %c0_5 = arith.constant 0 : index
    %c0_6 = arith.constant 0 : index
    %6 = vector.load %arg4[%c0_5, %c0_6] : memref<16x512xbf16, #tpu.memory_space<vmem>>, vector<16x512xbf16>
    %cst_7 = arith.constant dense<0.000000e+00> : vector<8x512xf32>
    %7 = tpu.matmul %5, %6, %cst_7 {dimension_numbers = #tpu.dot_dimension_numbers<[1], [0], [0], [1], [0, 0, 1, 1], [], []>} : vector<8x16xbf16>, vector<16x512xbf16>, vector<8x512xf32> -> vector<8x512xf32>
    %8 = arith.addf %3, %7 : vector<8x512xf32>
    %c0_8 = arith.constant 0 : index
    %c0_9 = arith.constant 0 : index
    %9 = vector.load %arg5[%c0_8, %c0_9] : memref<1x512xf32, #tpu.memory_space<vmem>>, vector<1x512xf32>
    %10 = vector.broadcast %9 : vector<1x512xf32> to vector<8x512xf32>
    %11 = arith.addf %8, %10 : vector<8x512xf32>
    %cst_10 = arith.constant 0.000000e+00 : f32
    %12 = vector.broadcast %cst_10 : f32 to vector<8x512xf32>
    %13 = arith.maximumf %11, %12 : vector<8x512xf32>
    %14 = arith.truncf %13 : vector<8x512xf32> to vector<8x512xbf16>
    %c0_11 = arith.constant 0 : index
    %c0_12 = arith.constant 0 : index
    %15 = vector.load %arg6[%c0_11, %c0_12] : memref<512x128xbf16, #tpu.memory_space<vmem>>, vector<512x128xbf16>
    %cst_13 = arith.constant dense<0.000000e+00> : vector<8x128xf32>
    %16 = tpu.matmul %14, %15, %cst_13 {dimension_numbers = #tpu.dot_dimension_numbers<[1], [0], [0], [1], [0, 0, 1, 1], [], []>} : vector<8x512xbf16>, vector<512x128xbf16>, vector<8x128xf32> -> vector<8x128xf32>
    %c0_14 = arith.constant 0 : index
    %c0_15 = arith.constant 0 : index
    %17 = vector.load %arg7[%c0_14, %c0_15] : memref<1x128xf32, #tpu.memory_space<vmem>>, vector<1x128xf32>
    %18 = vector.broadcast %17 : vector<1x128xf32> to vector<8x128xf32>
    %19 = arith.addf %16, %18 : vector<8x128xf32>
    %cst_16 = arith.constant 0.000000e+00 : f32
    %20 = vector.broadcast %cst_16 : f32 to vector<8x128xf32>
    %21 = arith.maximumf %19, %20 : vector<8x128xf32>
    %22 = arith.truncf %21 : vector<8x128xf32> to vector<8x128xbf16>
    %c0_17 = arith.constant 0 : index
    %c0_18 = arith.constant 0 : index
    %23 = vector.load %arg8[%c0_17, %c0_18] : memref<128x32xbf16, #tpu.memory_space<vmem>>, vector<128x32xbf16>
    %cst_19 = arith.constant dense<0.000000e+00> : vector<8x32xf32>
    %24 = tpu.matmul %22, %23, %cst_19 {dimension_numbers = #tpu.dot_dimension_numbers<[1], [0], [0], [1], [0, 0, 1, 1], [], []>} : vector<8x128xbf16>, vector<128x32xbf16>, vector<8x32xf32> -> vector<8x32xf32>
    %c0_20 = arith.constant 0 : index
    %c0_21 = arith.constant 0 : index
    %25 = vector.load %arg9[%c0_20, %c0_21] : memref<1x32xf32, #tpu.memory_space<vmem>>, vector<1x32xf32>
    %26 = vector.broadcast %25 : vector<1x32xf32> to vector<8x32xf32>
    %27 = arith.addf %24, %26 : vector<8x32xf32>
    %cst_22 = arith.constant 0.000000e+00 : f32
    %28 = vector.broadcast %cst_22 : f32 to vector<8x32xf32>
    %29 = arith.maximumf %27, %28 : vector<8x32xf32>
    %30 = arith.truncf %29 : vector<8x32xf32> to vector<8x32xbf16>
    %c0_23 = arith.constant 0 : index
    %c0_24 = arith.constant 0 : index
    %31 = vector.load %arg10[%c0_23, %c0_24] : memref<32x128xbf16, #tpu.memory_space<vmem>>, vector<32x128xbf16>
    %cst_25 = arith.constant dense<0.000000e+00> : vector<8x128xf32>
    %32 = tpu.matmul %30, %31, %cst_25 {dimension_numbers = #tpu.dot_dimension_numbers<[1], [0], [0], [1], [0, 0, 1, 1], [], []>} : vector<8x32xbf16>, vector<32x128xbf16>, vector<8x128xf32> -> vector<8x128xf32>
    %c0_26 = arith.constant 0 : index
    %c0_27 = arith.constant 0 : index
    %33 = vector.load %arg11[%c0_26, %c0_27] : memref<1x128xf32, #tpu.memory_space<vmem>>, vector<1x128xf32>
    %34 = vector.broadcast %33 : vector<1x128xf32> to vector<8x128xf32>
    %35 = arith.addf %32, %34 : vector<8x128xf32>
    %cst_28 = arith.constant 5.000000e-01 : f32
    %36 = vector.broadcast %cst_28 : f32 to vector<8x128xf32>
    %37 = arith.mulf %36, %35 : vector<8x128xf32>
    %38 = math.tanh %37 : vector<8x128xf32>
    %cst_29 = arith.constant 5.000000e-01 : f32
    %39 = vector.broadcast %cst_29 : f32 to vector<8x128xf32>
    %40 = arith.mulf %39, %38 : vector<8x128xf32>
    %c0_30 = arith.constant 0 : index
    %c0_31 = arith.constant 0 : index
    %41 = vector.load %arg12[%c0_30, %c0_31] : memref<8x128xf32, #tpu.memory_space<vmem>>, vector<8x128xf32>
    tpu.vector_store %arg12[%c0_30, %c0_31], %40 {strides = array<i32>} : memref<8x128xf32, #tpu.memory_space<vmem>>, vector<8x128xf32>,
    return
  }
  func.func @transform_0(%arg0: i32) -> (i32, i32) {
    %c0_i32 = arith.constant 0 : i32
    %c0_i32_0 = arith.constant 0 : i32
    return %arg0, %c0_i32 : i32, i32
  }
  func.func @transform_1(%arg0: i32) -> (i32, i32) {
    %c0_i32 = arith.constant 0 : i32
    %c0_i32_0 = arith.constant 0 : i32
    return %arg0, %c0_i32 : i32, i32
  }
  func.func @transform_2(%arg0: i32) -> (i32, i32) {
    %c0_i32 = arith.constant 0 : i32
    %c0_i32_0 = arith.constant 0 : i32
    %c0_i32_1 = arith.constant 0 : i32
    return %c0_i32, %c0_i32_0 : i32, i32
  }
  func.func @transform_3(%arg0: i32) -> (i32, i32) {
    %c0_i32 = arith.constant 0 : i32
    %c0_i32_0 = arith.constant 0 : i32
    %c0_i32_1 = arith.constant 0 : i32
    return %c0_i32, %c0_i32_0 : i32, i32
  }
  func.func @transform_4(%arg0: i32) -> (i32, i32) {
    %c0_i32 = arith.constant 0 : i32
    %c0_i32_0 = arith.constant 0 : i32
    %c0_i32_1 = arith.constant 0 : i32
    return %c0_i32, %c0_i32_0 : i32, i32
  }
  func.func @transform_5(%arg0: i32) -> (i32, i32) {
    %c0_i32 = arith.constant 0 : i32
    %c0_i32_0 = arith.constant 0 : i32
    %c0_i32_1 = arith.constant 0 : i32
    return %c0_i32, %c0_i32_0 : i32, i32
  }
  func.func @transform_6(%arg0: i32) -> (i32, i32) {
    %c0_i32 = arith.constant 0 : i32
    %c0_i32_0 = arith.constant 0 : i32
    %c0_i32_1 = arith.constant 0 : i32
    return %c0_i32, %c0_i32_0 : i32, i32
  }
  func.func @transform_7(%arg0: i32) -> (i32, i32) {
    %c0_i32 = arith.constant 0 : i32
    %c0_i32_0 = arith.constant 0 : i32
    %c0_i32_1 = arith.constant 0 : i32
    return %c0_i32, %c0_i32_0 : i32, i32
  }
  func.func @transform_8(%arg0: i32) -> (i32, i32) {
    %c0_i32 = arith.constant 0 : i32
    %c0_i32_0 = arith.constant 0 : i32
    %c0_i32_1 = arith.constant 0 : i32
    return %c0_i32, %c0_i32_0 : i32, i32
  }
  func.func @transform_9(%arg0: i32) -> (i32, i32) {
    %c0_i32 = arith.constant 0 : i32
    %c0_i32_0 = arith.constant 0 : i32
    %c0_i32_1 = arith.constant 0 : i32
    return %c0_i32, %c0_i32_0 : i32, i32
  }
  func.func @transform_10(%arg0: i32) -> (i32, i32) {
    %c0_i32 = arith.constant 0 : i32
    %c0_i32_0 = arith.constant 0 : i32
    %c0_i32_1 = arith.constant 0 : i32
    return %c0_i32, %c0_i32_0 : i32, i32
  }
  func.func @transform_11(%arg0: i32) -> (i32, i32) {
    %c0_i32 = arith.constant 0 : i32
    %c0_i32_0 = arith.constant 0 : i32
    return %arg0, %c0_i32 : i32, i32
  }
}

</mosaic_0001>

<llo_original>
// kernel: tpu_custom_call.1
$region0: #{tpu_custom_call.1}
  #allocation0 [shape = 'u32[]', space=smem, size = 0x4, offset = 0x4, fixed_abs, tag = 'smem constant byte address 0x4 - core index']
  #allocation1 [shape = 'u32[72,128]{1,0:T(1,128)}', space=vmem, size = 0x9000, scoped, tag = 'internal scratch']
  %s0 = inlined_call_operand.hbm [shape: f32[8,32], index: 0, kind: input, shape index: {}]
  %s1 = inlined_call_operand.hbm [shape: f32[8,16], index: 1, kind: input, shape index: {}]
  %s2 = inlined_call_operand.vmem [shape: bf16[32,512], index: 2, kind: input, shape index: {}]
  %s3 = inlined_call_operand.hbm [shape: bf16[16,512], index: 3, kind: input, shape index: {}]
  %s4 = inlined_call_operand.hbm [shape: f32[1,512], index: 4, kind: input, shape index: {}]
  %s5 = inlined_call_operand.hbm [shape: bf16[512,128], index: 5, kind: input, shape index: {}]
  %s6 = inlined_call_operand.vmem [shape: f32[1,128], index: 6, kind: input, shape index: {}]
  %s7 = inlined_call_operand.vmem [shape: bf16[128,32], index: 7, kind: input, shape index: {}]
  %s8 = inlined_call_operand.vmem [shape: f32[1,32], index: 8, kind: input, shape index: {}]
  %s9 = inlined_call_operand.vmem [shape: bf16[32,128], index: 9, kind: input, shape index: {}]
  %s10 = inlined_call_operand.vmem [shape: f32[1,128], index: 10, kind: input, shape index: {}]
  %s11 = inlined_call_operand.hbm [shape: f32[8,128], index: 11, kind: output, shape index: {}]
  %s12 = sld [smem:[#allocation0]]
  $region74: #{tpu_custom_call.1} parent=0
    _
  %s14 = ssub.s32 1, %s12
  %s15 = scalar_select 0, %s14, %s12
  $region1: #{tpu_custom_call.1} parent=0
    #allocation2 [shape = 'u8[4096]{0}', space=vmem, size = 0x1000, scoped, tag = 'input window, operand 0, single buffered']
    #allocation3 [shape = 's32[1]{0}', space=sflag, size = 0x4, scoped, tag = 'scoped memory for tpu_custom_call.1']
    #allocation4 [shape = 's32[1]{0}', space=sflag, size = 0x4, scoped, tag = 'scoped memory for tpu_custom_call.1']
    #allocation5 [shape = 'u8[4096]{0}', space=vmem, size = 0x1000, scoped, tag = 'input window, operand 1, single buffered']
    #allocation6 [shape = 's32[1]{0}', space=sflag, size = 0x4, scoped, tag = 'scoped memory for tpu_custom_call.1']
    #allocation7 [shape = 'u8[16384]{0}', space=vmem, size = 0x4000, scoped, tag = 'input window, operand 3, single buffered']
    #allocation8 [shape = 'u8[2048]{0}', space=vmem, size = 0x800, scoped, tag = 'input window, operand 4, single buffered']
    #allocation9 [shape = 's32[1]{0}', space=sflag, size = 0x4, scoped, tag = 'scoped memory for tpu_custom_call.1']
    #allocation10 [shape = 'u8[131072]{0}', space=vmem, size = 0x20000, scoped, tag = 'input window, operand 5, single buffered']
    #allocation11 [shape = 'u8[4096]{0}', space=vmem, size = 0x1000, scoped, tag = 'output window, operand 0, single buffered']
    %16 = vsyncpa [#allocation3], 0
    %17 = vsyncpa [#allocation6], 0
    %18 = vsyncpa [#allocation9], 0
    %19 = vsyncpa [#allocation4], 0
    // Predicated region
    $region2: #{tpu_custom_call.1} parent=1 // pred_check
      _
    $region3: #{tpu_custom_call.1} parent=1 // pred_check_branch
      %21 = sbr.rel (0) target = $region5
    $region4: #{tpu_custom_call.1} parent=1 // pred_region
      %23 = vsyncadd [#allocation3], 0
      %s25 = sshll.u32 %s0, 4
      %s26 = int_to_ptr.hbm [resolvable:$true] %s25
      %s27 = sshll.u32 [#allocation2], 4
      %s28 = int_to_ptr.vmem [resolvable:$true] %s27
      %30 = dma.hbm_to_vmem [thread:$0]  %s26, 128, %s28, [#allocation3]
    $region5: #{tpu_custom_call.1} parent=1 // pred_fallthru
      _
    // Predicated region
    $region6: #{tpu_custom_call.1} parent=1 // pred_check
      _
    $region7: #{tpu_custom_call.1} parent=1 // pred_check_branch
      %32 = sbr.rel (0) target = $region9
    $region8: #{tpu_custom_call.1} parent=1 // pred_region
      %34 = vsyncadd [#allocation6], 0
      %s36 = sshll.u32 %s1, 4
      %s37 = int_to_ptr.hbm [resolvable:$true] %s36
      %s38 = sshll.u32 [#allocation5], 4
      %s39 = int_to_ptr.vmem [resolvable:$true] %s38
      %41 = dma.hbm_to_vmem [thread:$0]  %s37, 128, %s39, [#allocation6]
    $region9: #{tpu_custom_call.1} parent=1 // pred_fallthru
      _
    // Predicated region
    $region10: #{tpu_custom_call.1} parent=1 // pred_check
      _
    $region11: #{tpu_custom_call.1} parent=1 // pred_check_branch
      %43 = sbr.rel (0) target = $region13
    $region12: #{tpu_custom_call.1} parent=1 // pred_region
      _
    $region13: #{tpu_custom_call.1} parent=1 // pred_fallthru
      _
    // Predicated region
    $region14: #{tpu_custom_call.1} parent=1 // pred_check
      _
    $region15: #{tpu_custom_call.1} parent=1 // pred_check_branch
      %45 = sbr.rel (0) target = $region17
    $region16: #{tpu_custom_call.1} parent=1 // pred_region
      %47 = vsyncadd [#allocation6], 0
      %s48 = sshll.u32 %s3, 4
      %s49 = int_to_ptr.hbm [resolvable:$true] %s48
      %s50 = sshll.u32 [#allocation7], 4
      %s51 = int_to_ptr.vmem [resolvable:$true] %s50
      %56 = dma.hbm_to_vmem [thread:$0]  %s49, 512, %s51, [#allocation6], 256, 256, 16
    $region17: #{tpu_custom_call.1} parent=1 // pred_fallthru
      _
    // Predicated region
    $region18: #{tpu_custom_call.1} parent=1 // pred_check
      _
    $region19: #{tpu_custom_call.1} parent=1 // pred_check_branch
      %58 = sbr.rel (0) target = $region21
    $region20: #{tpu_custom_call.1} parent=1 // pred_region
      %60 = vsyncadd [#allocation9], 0
      %s62 = sshll.u32 %s4, 4
      %s63 = int_to_ptr.hbm [resolvable:$true] %s62
      %s64 = sshll.u32 [#allocation8], 4
      %s65 = int_to_ptr.vmem [resolvable:$true] %s64
      %67 = dma.hbm_to_vmem [thread:$0]  %s63, 64, %s65, [#allocation9]
    $region21: #{tpu_custom_call.1} parent=1 // pred_fallthru
      _
    // Predicated region
    $region22: #{tpu_custom_call.1} parent=1 // pred_check
      _
    $region23: #{tpu_custom_call.1} parent=1 // pred_check_branch
      %69 = sbr.rel (0) target = $region25
    $region24: #{tpu_custom_call.1} parent=1 // pred_region
      %71 = vsyncadd [#allocation9], 0
      %s72 = sshll.u32 %s5, 4
      %s73 = int_to_ptr.hbm [resolvable:$true] %s72
      %s74 = sshll.u32 [#allocation10], 4
      %s75 = int_to_ptr.vmem [resolvable:$true] %s74
      %80 = dma.hbm_to_vmem [thread:$0]  %s73, 4096, %s75, [#allocation9], 64, 64, 4
    $region25: #{tpu_custom_call.1} parent=1 // pred_fallthru
      _
    // Predicated region
    $region26: #{tpu_custom_call.1} parent=1 // pred_check
      _
    $region27: #{tpu_custom_call.1} parent=1 // pred_check_branch
      %82 = sbr.rel (0) target = $region29
    $region28: #{tpu_custom_call.1} parent=1 // pred_region
      _
    $region29: #{tpu_custom_call.1} parent=1 // pred_fallthru
      _
    // Predicated region
    $region30: #{tpu_custom_call.1} parent=1 // pred_check
      _
    $region31: #{tpu_custom_call.1} parent=1 // pred_check_branch
      %84 = sbr.rel (0) target = $region33
    $region32: #{tpu_custom_call.1} parent=1 // pred_region
      _
    $region33: #{tpu_custom_call.1} parent=1 // pred_fallthru
      _
    // Predicated region
    $region34: #{tpu_custom_call.1} parent=1 // pred_check
      _
    $region35: #{tpu_custom_call.1} parent=1 // pred_check_branch
      %86 = sbr.rel (0) target = $region37
    $region36: #{tpu_custom_call.1} parent=1 // pred_region
      _
    $region37: #{tpu_custom_call.1} parent=1 // pred_fallthru
      _
    // Predicated region
    $region38: #{tpu_custom_call.1} parent=1 // pred_check
      _
    $region39: #{tpu_custom_call.1} parent=1 // pred_check_branch
      %88 = sbr.rel (0) target = $region41
    $region40: #{tpu_custom_call.1} parent=1 // pred_region
      _
    $region41: #{tpu_custom_call.1} parent=1 // pred_fallthru
      _
    // Predicated region
    $region42: #{tpu_custom_call.1} parent=1 // pred_check
      _
    $region43: #{tpu_custom_call.1} parent=1 // pred_check_branch
      %90 = sbr.rel (0) target = $region45
    $region44: #{tpu_custom_call.1} parent=1 // pred_region
      _
    $region45: #{tpu_custom_call.1} parent=1 // pred_fallthru
      _
    // Predicated region
    $region46: #{tpu_custom_call.1} parent=1 // pred_check
      _
    $region47: #{tpu_custom_call.1} parent=1 // pred_check_branch
      %92 = sbr.rel (0) target = $region49
    $region48: #{tpu_custom_call.1} parent=1 // pred_region
      %94 = dma.done [#allocation3], 128
    $region49: #{tpu_custom_call.1} parent=1 // pred_fallthru
      _
    // Predicated region
    $region50: #{tpu_custom_call.1} parent=1 // pred_check
      _
    $region51: #{tpu_custom_call.1} parent=1 // pred_check_branch
      %96 = sbr.rel (0) target = $region53
    $region52: #{tpu_custom_call.1} parent=1 // pred_region
      %98 = dma.done [#allocation6], 128
    $region53: #{tpu_custom_call.1} parent=1 // pred_fallthru
      _
    // Predicated region
    $region54: #{tpu_custom_call.1} parent=1 // pred_check
      _
    $region55: #{tpu_custom_call.1} parent=1 // pred_check_branch
      %100 = sbr.rel (0) target = $region57
    $region56: #{tpu_custom_call.1} parent=1 // pred_region
      %102 = dma.done [#allocation6], 512
    $region57: #{tpu_custom_call.1} parent=1 // pred_fallthru
      _
    // Predicated region
    $region58: #{tpu_custom_call.1} parent=1 // pred_check
      _
    $region59: #{tpu_custom_call.1} parent=1 // pred_check_branch
      %104 = sbr.rel (0) target = $region61
    $region60: #{tpu_custom_call.1} parent=1 // pred_region
      %106 = dma.done [#allocation9], 64
    $region61: #{tpu_custom_call.1} parent=1 // pred_fallthru
      _
    // Predicated region
    $region62: #{tpu_custom_call.1} parent=1 // pred_check
      _
    $region63: #{tpu_custom_call.1} parent=1 // pred_check_branch
      %108 = sbr.rel (0) target = $region65
    $region64: #{tpu_custom_call.1} parent=1 // pred_region
      %110 = dma.done [#allocation9], 4096
    $region65: #{tpu_custom_call.1} parent=1 // pred_fallthru
      _
    %v112 = vld [vmem:[#allocation2] sm:$0xff]
    %v113 = vpack.c.bf16 %v112, %v112
    %v114 = vld [vmem:[%s2] sm:$0xff]
    %v115 = vld [vmem:[%s2 + $0x8] sm:$0xff]
    %v116 = vld [vmem:[%s2 + $0x10] sm:$0xff]
    %v117 = vld [vmem:[%s2 + $0x18] sm:$0xff]
    %v118 = vld [vmem:[%s2 + $0x20] sm:$0xff]
    %v119 = vld [vmem:[%s2 + $0x28] sm:$0xff]
    %v120 = vld [vmem:[%s2 + $0x30] sm:$0xff]
    %v121 = vld [vmem:[%s2 + $0x38] sm:$0xff]
    %v122 = vld [vmem:[#allocation5] sm:$0xff]
    %v123 = vpack.c.bf16 %v122, %v122
    %v124 = vld [vmem:[#allocation7] sm:$0xff]
    %v125 = vld [vmem:[#allocation7 + $0x8] sm:$0xff]
    %v126 = vld [vmem:[#allocation7 + $0x10] sm:$0xff]
    %v127 = vld [vmem:[#allocation7 + $0x18] sm:$0xff]
    %v132 = vunpack.c.l.b16 %v124
    %v133 = vunpack.c.h.b16 %v124
    %v134 = vunpack.c.l.b16 %v125
    %v135 = vunpack.c.h.b16 %v125
    %v136 = vunpack.c.l.b16 %v126
    %v137 = vunpack.c.h.b16 %v126
    %v138 = vunpack.c.l.b16 %v127
    %v139 = vunpack.c.h.b16 %v127
    %v140 = vpack.c.b16 %v136, %v132
    %v141 = vpack.c.b16 %v137, %v133
    %v142 = vpack.c.b16 %v138, %v134
    %v143 = vpack.c.b16 %v139, %v135
    %vm148 = vcmask 130048
    %v150 = vsel %vm148, %v123, 0
    %152 = vmatpush.bf16.msra.mxu0 0
    %153 = vmatpush.bf16.msra.mxu0 0
    %154 = vmatpush.bf16.msra.mxu0 0
    %155 = vmatpush.bf16.msra.mxu0 0
    %156 = vmatpush.bf16.msra.mxu0 0
    %157 = vmatpush.bf16.msra.mxu0 0
    %158 = vmatpush.bf16.msra.mxu0 0
    %159 = vmatpush.bf16.msra.mxu0 %v140
    %160 = vmatmul.bf16.gmra.mxu0 %v150
    %v161 = vpop.f32.mrf.mxu0
    %v162 = vadd.f32 0.0, %v161
    %v163 = vpop.f32.mrf.mxu0
    %164 = vdwg.mxu0
    %165 = vmatpush.bf16.msra.mxu0 0
    %166 = vmatpush.bf16.msra.mxu0 0
    %167 = vmatpush.bf16.msra.mxu0 0
    %168 = vmatpush.bf16.msra.mxu0 0
    %169 = vmatpush.bf16.msra.mxu0 0
    %170 = vmatpush.bf16.msra.mxu0 0
    %171 = vmatpush.bf16.msra.mxu0 0
    %172 = vmatpush.bf16.msra.mxu0 %v141
    %173 = vmatmul.bf16.gmra.mxu0 %v150
    %v174 = vpop.f32.mrf.mxu0
    %v175 = vadd.f32 0.0, %v174
    %v176 = vpop.f32.mrf.mxu0
    %177 = vdwg.mxu0
    %178 = vmatpush.bf16.msra.mxu0 0
    %179 = vmatpush.bf16.msra.mxu0 0
    %180 = vmatpush.bf16.msra.mxu0 0
    %181 = vmatpush.bf16.msra.mxu0 0
    %182 = vmatpush.bf16.msra.mxu0 0
    %183 = vmatpush.bf16.msra.mxu0 0
    %184 = vmatpush.bf16.msra.mxu0 0
    %185 = vmatpush.bf16.msra.mxu0 %v142
    %186 = vmatmul.bf16.gmra.mxu0 %v150
    %v187 = vpop.f32.mrf.mxu0
    %v188 = vadd.f32 0.0, %v187
    %v189 = vpop.f32.mrf.mxu0
    %190 = vdwg.mxu0
    %191 = vmatpush.bf16.msra.mxu0 0
    %192 = vmatpush.bf16.msra.mxu0 0
    %193 = vmatpush.bf16.msra.mxu0 0
    %194 = vmatpush.bf16.msra.mxu0 0
    %195 = vmatpush.bf16.msra.mxu0 0
    %196 = vmatpush.bf16.msra.mxu0 0
    %197 = vmatpush.bf16.msra.mxu0 0
    %198 = vmatpush.bf16.msra.mxu0 %v143
    %199 = vmatmul.bf16.gmra.mxu0 %v150
    %v200 = vpop.f32.mrf.mxu0
    %v201 = vadd.f32 0.0, %v200
    %v202 = vpop.f32.mrf.mxu0
    %203 = vdwg.mxu0
    %v212 = vunpack.c.l.b16 %v114
    %v213 = vunpack.c.h.b16 %v114
    %v214 = vunpack.c.l.b16 %v115
    %v215 = vunpack.c.h.b16 %v115
    %v216 = vunpack.c.l.b16 %v116
    %v217 = vunpack.c.h.b16 %v116
    %v218 = vunpack.c.l.b16 %v117
    %v219 = vunpack.c.h.b16 %v117
    %v220 = vunpack.c.l.b16 %v118
    %v221 = vunpack.c.h.b16 %v118
    %v222 = vunpack.c.l.b16 %v119
    %v223 = vunpack.c.h.b16 %v119
    %v224 = vunpack.c.l.b16 %v120
    %v225 = vunpack.c.h.b16 %v120
    %v226 = vunpack.c.l.b16 %v121
    %v227 = vunpack.c.h.b16 %v121
    %v228 = vpack.c.b16 %v216, %v212
    %v229 = vpack.c.b16 %v217, %v213
    %v230 = vpack.c.b16 %v218, %v214
    %v231 = vpack.c.b16 %v219, %v215
    %v232 = vpack.c.b16 %v224, %v220
    %v233 = vpack.c.b16 %v225, %v221
    %v234 = vpack.c.b16 %v226, %v222
    %v235 = vpack.c.b16 %v227, %v223
    %vm244 = vcmask 261120
    %v246 = vsel %vm244, %v113, 0
    %248 = vmatpush.bf16.msra.mxu0 0
    %249 = vmatpush.bf16.msra.mxu0 0
    %250 = vmatpush.bf16.msra.mxu0 0
    %251 = vmatpush.bf16.msra.mxu0 0
    %252 = vmatpush.bf16.msra.mxu0 0
    %253 = vmatpush.bf16.msra.mxu0 0
    %254 = vmatpush.bf16.msra.mxu0 %v232
    %255 = vmatpush.bf16.msra.mxu0 %v228
    %256 = vmatmul.bf16.gmra.mxu0 %v246
    %v257 = vpop.f32.mrf.mxu0
    %v258 = vadd.f32 %v162, %v257
    %v259 = vpop.f32.mrf.mxu0
    %260 = vdwg.mxu0
    %261 = vmatpush.bf16.msra.mxu0 0
    %262 = vmatpush.bf16.msra.mxu0 0
    %263 = vmatpush.bf16.msra.mxu0 0
    %264 = vmatpush.bf16.msra.mxu0 0
    %265 = vmatpush.bf16.msra.mxu0 0
    %266 = vmatpush.bf16.msra.mxu0 0
    %267 = vmatpush.bf16.msra.mxu0 %v233
    %268 = vmatpush.bf16.msra.mxu0 %v229
    %269 = vmatmul.bf16.gmra.mxu0 %v246
    %v270 = vpop.f32.mrf.mxu0
    %v271 = vadd.f32 %v175, %v270
    %v272 = vpop.f32.mrf.mxu0
    %273 = vdwg.mxu0
    %274 = vmatpush.bf16.msra.mxu0 0
    %275 = vmatpush.bf16.msra.mxu0 0
    %276 = vmatpush.bf16.msra.mxu0 0
    %277 = vmatpush.bf16.msra.mxu0 0
    %278 = vmatpush.bf16.msra.mxu0 0
    %279 = vmatpush.bf16.msra.mxu0 0
    %280 = vmatpush.bf16.msra.mxu0 %v234
    %281 = vmatpush.bf16.msra.mxu0 %v230
    %282 = vmatmul.bf16.gmra.mxu0 %v246
    %v283 = vpop.f32.mrf.mxu0
    %v284 = vadd.f32 %v188, %v283
    %v285 = vpop.f32.mrf.mxu0
    %286 = vdwg.mxu0
    %287 = vmatpush.bf16.msra.mxu0 0
    %288 = vmatpush.bf16.msra.mxu0 0
    %289 = vmatpush.bf16.msra.mxu0 0
    %290 = vmatpush.bf16.msra.mxu0 0
    %291 = vmatpush.bf16.msra.mxu0 0
    %292 = vmatpush.bf16.msra.mxu0 0
    %293 = vmatpush.bf16.msra.mxu0 %v235
    %294 = vmatpush.bf16.msra.mxu0 %v231
    %295 = vmatmul.bf16.gmra.mxu0 %v246
    %v296 = vpop.f32.mrf.mxu0
    %v297 = vadd.f32 %v201, %v296
    %v298 = vpop.f32.mrf.mxu0
    %299 = vdwg.mxu0
    %v300 = vld [vmem:[#allocation8] sm:$0xf]
    %v302 = vperm.slane %v300, 0
    %v303 = vperm.slane %v300, 1
    %v304 = vperm.slane %v300, 2
    %v305 = vperm.slane %v300, 3
    %v310 = vadd.f32 %v258, %v302
    %v311 = vadd.f32 %v271, %v303
    %v312 = vadd.f32 %v284, %v304
    %v313 = vadd.f32 %v297, %v305
    %v314 = vmax.f32 %v310, 0.0
    %v315 = vmax.f32 %v311, 0.0
    %v316 = vmax.f32 %v312, 0.0
    %v317 = vmax.f32 %v313, 0.0
    %v318 = vpack.c.bf16 %v314, %v314
    %v319 = vpack.c.bf16 %v315, %v315
    %v320 = vpack.c.bf16 %v316, %v316
    %v321 = vpack.c.bf16 %v317, %v317
    %v322 = vld [vmem:[#allocation10] sm:$0xf]
    %v323 = vld [vmem:[#allocation10 + $0x4] sm:$0xf]
    %v324 = vld [vmem:[#allocation10 + $0x8] sm:$0xf]
    %v325 = vld [vmem:[#allocation10 + $0xc] sm:$0xf]
    %v326 = vld [vmem:[#allocation10 + $0x10] sm:$0xf]
    %v327 = vld [vmem:[#allocation10 + $0x14] sm:$0xf]
    %v328 = vld [vmem:[#allocation10 + $0x18] sm:$0xf]
    %v329 = vld [vmem:[#allocation10 + $0x1c] sm:$0xf]
    %v330 = vld [vmem:[#allocation10 + $0x20] sm:$0xf]
    %v331 = vld [vmem:[#allocation10 + $0x24] sm:$0xf]
    %v332 = vld [vmem:[#allocation10 + $0x28] sm:$0xf]
    %v333 = vld [vmem:[#allocation10 + $0x2c] sm:$0xf]
    %v334 = vld [vmem:[#allocation10 + $0x30] sm:$0xf]
    %v335 = vld [vmem:[#allocation10 + $0x34] sm:$0xf]
    %v336 = vld [vmem:[#allocation10 + $0x38] sm:$0xf]
    %v337 = vld [vmem:[#allocation10 + $0x3c] sm:$0xf]
    %v338 = vld [vmem:[#allocation10 + $0x40] sm:$0xf]
    %v339 = vld [vmem:[#allocation10 + $0x44] sm:$0xf]
    %v340 = vld [vmem:[#allocation10 + $0x48] sm:$0xf]
    %v341 = vld [vmem:[#allocation10 + $0x4c] sm:$0xf]
    %v342 = vld [vmem:[#allocation10 + $0x50] sm:$0xf]
    %v343 = vld [vmem:[#allocation10 + $0x54] sm:$0xf]
    %v344 = vld [vmem:[#allocation10 + $0x58] sm:$0xf]
    %v345 = vld [vmem:[#allocation10 + $0x5c] sm:$0xf]
    %v346 = vld [vmem:[#allocation10 + $0x60] sm:$0xf]
    %v347 = vld [vmem:[#allocation10 + $0x64] sm:$0xf]
    %v348 = vld [vmem:[#allocation10 + $0x68] sm:$0xf]
    %v349 = vld [vmem:[#allocation10 + $0x6c] sm:$0xf]
    %v350 = vld [vmem:[#allocation10 + $0x70] sm:$0xf]
    %v351 = vld [vmem:[#allocation10 + $0x74] sm:$0xf]
    %v352 = vld [vmem:[#allocation10 + $0x78] sm:$0xf]
    %v353 = vld [vmem:[#allocation10 + $0x7c] sm:$0xf]
    %v354 = vld [vmem:[#allocation10 + $0x80] sm:$0xf]
    %v355 = vld [vmem:[#allocation10 + $0x84] sm:$0xf]
    %v356 = vld [vmem:[#allocation10 + $0x88] sm:$0xf]
    %v357 = vld [vmem:[#allocation10 + $0x8c] sm:$0xf]
    %v358 = vld [vmem:[#allocation10 + $0x90] sm:$0xf]
    %v359 = vld [vmem:[#allocation10 + $0x94] sm:$0xf]
    %v360 = vld [vmem:[#allocation10 + $0x98] sm:$0xf]
    %v361 = vld [vmem:[#allocation10 + $0x9c] sm:$0xf]
    %v362 = vld [vmem:[#allocation10 + $0xa0] sm:$0xf]
    %v363 = vld [vmem:[#allocation10 + $0xa4] sm:$0xf]
    %v364 = vld [vmem:[#allocation10 + $0xa8] sm:$0xf]
    %v365 = vld [vmem:[#allocation10 + $0xac] sm:$0xf]
    %v366 = vld [vmem:[#allocation10 + $0xb0] sm:$0xf]
    %v367 = vld [vmem:[#allocation10 + $0xb4] sm:$0xf]
    %v368 = vld [vmem:[#allocation10 + $0xb8] sm:$0xf]
    %v369 = vld [vmem:[#allocation10 + $0xbc] sm:$0xf]
    %v370 = vld [vmem:[#allocation10 + $0xc0] sm:$0xf]
    %v371 = vld [vmem:[#allocation10 + $0xc4] sm:$0xf]
    %v372 = vld [vmem:[#allocation10 + $0xc8] sm:$0xf]
    %v373 = vld [vmem:[#allocation10 + $0xcc] sm:$0xf]
    %v374 = vld [vmem:[#allocation10 + $0xd0] sm:$0xf]
    %v375 = vld [vmem:[#allocation10 + $0xd4] sm:$0xf]
    %v376 = vld [vmem:[#allocation10 + $0xd8] sm:$0xf]
    %v377 = vld [vmem:[#allocation10 + $0xdc] sm:$0xf]
    %v378 = vld [vmem:[#allocation10 + $0xe0] sm:$0xf]
    %v379 = vld [vmem:[#allocation10 + $0xe4] sm:$0xf]
    %v380 = vld [vmem:[#allocation10 + $0xe8] sm:$0xf]
    %v381 = vld [vmem:[#allocation10 + $0xec] sm:$0xf]
    %v382 = vld [vmem:[#allocation10 + $0xf0] sm:$0xf]
    %v383 = vld [vmem:[#allocation10 + $0xf4] sm:$0xf]
    %v384 = vld [vmem:[#allocation10 + $0xf8] sm:$0xf]
    %v385 = vld [vmem:[#allocation10 + $0xfc] sm:$0xf]
    %v386 = vld [vmem:[%s6] sm:$0x1]
    %v388 = vperm.slane %v386, 0
    %v454 = vunpack.c.l.b16 %v322
    %v455 = vunpack.c.l.b16 %v323
    %v456 = vunpack.c.l.b16 %v324
    %v457 = vunpack.c.l.b16 %v325
    %v458 = vunpack.c.l.b16 %v326
    %v459 = vunpack.c.l.b16 %v327
    %v460 = vunpack.c.l.b16 %v328
    %v461 = vunpack.c.l.b16 %v329
    %v462 = vunpack.c.l.b16 %v330
    %v463 = vunpack.c.l.b16 %v331
    %v464 = vunpack.c.l.b16 %v332
    %v465 = vunpack.c.l.b16 %v333
    %v466 = vunpack.c.l.b16 %v334
    %v467 = vunpack.c.l.b16 %v335
    %v468 = vunpack.c.l.b16 %v336
    %v469 = vunpack.c.l.b16 %v337
    %v470 = vunpack.c.l.b16 %v338
    %v471 = vunpack.c.l.b16 %v339
    %v472 = vunpack.c.l.b16 %v340
    %v473 = vunpack.c.l.b16 %v341
    %v474 = vunpack.c.l.b16 %v342
    %v475 = vunpack.c.l.b16 %v343
    %v476 = vunpack.c.l.b16 %v344
    %v477 = vunpack.c.l.b16 %v345
    %v478 = vunpack.c.l.b16 %v346
    %v479 = vunpack.c.l.b16 %v347
    %v480 = vunpack.c.l.b16 %v348
    %v481 = vunpack.c.l.b16 %v349
    %v482 = vunpack.c.l.b16 %v350
    %v483 = vunpack.c.l.b16 %v351
    %v484 = vunpack.c.l.b16 %v352
    %v485 = vunpack.c.l.b16 %v353
    %v486 = vunpack.c.l.b16 %v354
    %v487 = vunpack.c.l.b16 %v355
    %v488 = vunpack.c.l.b16 %v356
    %v489 = vunpack.c.l.b16 %v357
    %v490 = vunpack.c.l.b16 %v358
    %v491 = vunpack.c.l.b16 %v359
    %v492 = vunpack.c.l.b16 %v360
    %v493 = vunpack.c.l.b16 %v361
    %v494 = vunpack.c.l.b16 %v362
    %v495 = vunpack.c.l.b16 %v363
    %v496 = vunpack.c.l.b16 %v364
    %v497 = vunpack.c.l.b16 %v365
    %v498 = vunpack.c.l.b16 %v366
    %v499 = vunpack.c.l.b16 %v367
    %v500 = vunpack.c.l.b16 %v368
    %v501 = vunpack.c.l.b16 %v369
    %v502 = vunpack.c.l.b16 %v370
    %v503 = vunpack.c.l.b16 %v371
    %v504 = vunpack.c.l.b16 %v372
    %v505 = vunpack.c.l.b16 %v373
    %v506 = vunpack.c.l.b16 %v374
    %v507 = vunpack.c.l.b16 %v375
    %v508 = vunpack.c.l.b16 %v376
    %v509 = vunpack.c.l.b16 %v377
    %v510 = vunpack.c.l.b16 %v378
    %v511 = vunpack.c.l.b16 %v379
    %v512 = vunpack.c.l.b16 %v380
    %v513 = vunpack.c.l.b16 %v381
    %v514 = vunpack.c.l.b16 %v382
    %v515 = vunpack.c.l.b16 %v383
    %v516 = vunpack.c.l.b16 %v384
    %v517 = vunpack.c.l.b16 %v385
    %v518 = vpack.c.b16 %v455, %v454
    %v519 = vpack.c.b16 %v457, %v456
    %v520 = vpack.c.b16 %v459, %v458
    %v521 = vpack.c.b16 %v461, %v460
    %v522 = vpack.c.b16 %v463, %v462
    %v523 = vpack.c.b16 %v465, %v464
    %v524 = vpack.c.b16 %v467, %v466
    %v525 = vpack.c.b16 %v469, %v468
    %v526 = vpack.c.b16 %v471, %v470
    %v527 = vpack.c.b16 %v473, %v472
    %v528 = vpack.c.b16 %v475, %v474
    %v529 = vpack.c.b16 %v477, %v476
    %v530 = vpack.c.b16 %v479, %v478
    %v531 = vpack.c.b16 %v481, %v480
    %v532 = vpack.c.b16 %v483, %v482
    %v533 = vpack.c.b16 %v485, %v484
    %v534 = vpack.c.b16 %v487, %v486
    %v535 = vpack.c.b16 %v489, %v488
    %v536 = vpack.c.b16 %v491, %v490
    %v537 = vpack.c.b16 %v493, %v492
    %v538 = vpack.c.b16 %v495, %v494
    %v539 = vpack.c.b16 %v497, %v496
    %v540 = vpack.c.b16 %v499, %v498
    %v541 = vpack.c.b16 %v501, %v500
    %v542 = vpack.c.b16 %v503, %v502
    %v543 = vpack.c.b16 %v505, %v504
    %v544 = vpack.c.b16 %v507, %v506
    %v545 = vpack.c.b16 %v509, %v508
    %v546 = vpack.c.b16 %v511, %v510
    %v547 = vpack.c.b16 %v513, %v512
    %v548 = vpack.c.b16 %v515, %v514
    %v549 = vpack.c.b16 %v517, %v516
    %582 = vmatpush.bf16.msra.mxu0 %v525
    %583 = vmatpush.bf16.msra.mxu0 %v524
    %584 = vmatpush.bf16.msra.mxu0 %v523
    %585 = vmatpush.bf16.msra.mxu0 %v522
    %586 = vmatpush.bf16.msra.mxu0 %v521
    %587 = vmatpush.bf16.msra.mxu0 %v520
    %588 = vmatpush.bf16.msra.mxu0 %v519
    %589 = vmatpush.bf16.msra.mxu0 %v518
    %590 = vmatmul.bf16.gmra.mxu0 %v318
    %v591 = vpop.f32.mrf.mxu0
    %v592 = vadd.f32 %v388, %v591
    %v593 = vpop.f32.mrf.mxu0
    %594 = vdwg.mxu0
    %595 = vmatpush.bf16.msra.mxu0 %v533
    %596 = vmatpush.bf16.msra.mxu0 %v532
    %597 = vmatpush.bf16.msra.mxu0 %v531
    %598 = vmatpush.bf16.msra.mxu0 %v530
    %599 = vmatpush.bf16.msra.mxu0 %v529
    %600 = vmatpush.bf16.msra.mxu0 %v528
    %601 = vmatpush.bf16.msra.mxu0 %v527
    %602 = vmatpush.bf16.msra.mxu0 %v526
    %603 = vmatmul.bf16.gmra.mxu0 %v319
    %v604 = vpop.f32.mrf.mxu0
    %v605 = vadd.f32 %v592, %v604
    %v606 = vpop.f32.mrf.mxu0
    %607 = vdwg.mxu0
    %608 = vmatpush.bf16.msra.mxu0 %v541
    %609 = vmatpush.bf16.msra.mxu0 %v540
    %610 = vmatpush.bf16.msra.mxu0 %v539
    %611 = vmatpush.bf16.msra.mxu0 %v538
    %612 = vmatpush.bf16.msra.mxu0 %v537
    %613 = vmatpush.bf16.msra.mxu0 %v536
    %614 = vmatpush.bf16.msra.mxu0 %v535
    %615 = vmatpush.bf16.msra.mxu0 %v534
    %616 = vmatmul.bf16.gmra.mxu0 %v320
    %v617 = vpop.f32.mrf.mxu0
    %v618 = vadd.f32 %v605, %v617
    %v619 = vpop.f32.mrf.mxu0
    %620 = vdwg.mxu0
    %621 = vmatpush.bf16.msra.mxu0 %v549
    %622 = vmatpush.bf16.msra.mxu0 %v548
    %623 = vmatpush.bf16.msra.mxu0 %v547
    %624 = vmatpush.bf16.msra.mxu0 %v546
    %625 = vmatpush.bf16.msra.mxu0 %v545
    %626 = vmatpush.bf16.msra.mxu0 %v544
    %627 = vmatpush.bf16.msra.mxu0 %v543
    %628 = vmatpush.bf16.msra.mxu0 %v542
    %629 = vmatmul.bf16.gmra.mxu0 %v321
    %v630 = vpop.f32.mrf.mxu0
    %v631 = vadd.f32 %v618, %v630
    %v632 = vpop.f32.mrf.mxu0
    %633 = vdwg.mxu0
    %v634 = vmax.f32 %v631, 0.0
    %v635 = vpack.c.bf16 %v634, %v634
    %v636 = vld [vmem:[%s7] sm:$0xf]
    %v637 = vld [vmem:[%s7 + $0x4] sm:$0xf]
    %v638 = vld [vmem:[%s7 + $0x8] sm:$0xf]
    %v639 = vld [vmem:[%s7 + $0xc] sm:$0xf]
    %v640 = vld [vmem:[%s7 + $0x10] sm:$0xf]
    %v641 = vld [vmem:[%s7 + $0x14] sm:$0xf]
    %v642 = vld [vmem:[%s7 + $0x18] sm:$0xf]
    %v643 = vld [vmem:[%s7 + $0x1c] sm:$0xf]
    %v644 = vld [vmem:[%s7 + $0x20] sm:$0xf]
    %v645 = vld [vmem:[%s7 + $0x24] sm:$0xf]
    %v646 = vld [vmem:[%s7 + $0x28] sm:$0xf]
    %v647 = vld [vmem:[%s7 + $0x2c] sm:$0xf]
    %v648 = vld [vmem:[%s7 + $0x30] sm:$0xf]
    %v649 = vld [vmem:[%s7 + $0x34] sm:$0xf]
    %v650 = vld [vmem:[%s7 + $0x38] sm:$0xf]
    %v651 = vld [vmem:[%s7 + $0x3c] sm:$0xf]
    %v652 = vld [vmem:[%s8] sm:$0x1]
    %v654 = vperm.slane %v652, 0
    %v672 = vunpack.c.l.b16 %v636
    %v673 = vunpack.c.l.b16 %v637
    %v674 = vunpack.c.l.b16 %v638
    %v675 = vunpack.c.l.b16 %v639
    %v676 = vunpack.c.l.b16 %v640
    %v677 = vunpack.c.l.b16 %v641
    %v678 = vunpack.c.l.b16 %v642
    %v679 = vunpack.c.l.b16 %v643
    %v680 = vunpack.c.l.b16 %v644
    %v681 = vunpack.c.l.b16 %v645
    %v682 = vunpack.c.l.b16 %v646
    %v683 = vunpack.c.l.b16 %v647
    %v684 = vunpack.c.l.b16 %v648
    %v685 = vunpack.c.l.b16 %v649
    %v686 = vunpack.c.l.b16 %v650
    %v687 = vunpack.c.l.b16 %v651
    %v688 = vpack.c.b16 %v673, %v672
    %v689 = vpack.c.b16 %v675, %v674
    %v690 = vpack.c.b16 %v677, %v676
    %v691 = vpack.c.b16 %v679, %v678
    %v692 = vpack.c.b16 %v681, %v680
    %v693 = vpack.c.b16 %v683, %v682
    %v694 = vpack.c.b16 %v685, %v684
    %v695 = vpack.c.b16 %v687, %v686
    %704 = vmatpush.bf16.msra.mxu0 %v695
    %705 = vmatpush.bf16.msra.mxu0 %v694
    %706 = vmatpush.bf16.msra.mxu0 %v693
    %707 = vmatpush.bf16.msra.mxu0 %v692
    %708 = vmatpush.bf16.msra.mxu0 %v691
    %709 = vmatpush.bf16.msra.mxu0 %v690
    %710 = vmatpush.bf16.msra.mxu0 %v689
    %711 = vmatpush.bf16.msra.mxu0 %v688
    %712 = vmatmul.bf16.gmra.mxu0 %v635
    %v713 = vpop.f32.mrf.mxu0
    %v714 = vadd.f32 %v654, %v713
    %v715 = vpop.f32.mrf.mxu0
    %716 = vdwg.mxu0
    %v717 = vmax.f32 %v714, 0.0
    %v718 = vpack.c.bf16 %v717, %v717
    %v719 = vld [vmem:[%s9] sm:$0xf]
    %v720 = vld [vmem:[%s9 + $0x4] sm:$0xf]
    %v721 = vld [vmem:[%s9 + $0x8] sm:$0xf]
    %v722 = vld [vmem:[%s9 + $0xc] sm:$0xf]
    %v723 = vld [vmem:[%s10] sm:$0x1]
    %v725 = vperm.slane %v723, 0
    %v731 = vunpack.c.l.b16 %v719
    %v732 = vunpack.c.l.b16 %v720
    %v733 = vunpack.c.l.b16 %v721
    %v734 = vunpack.c.l.b16 %v722
    %v735 = vpack.c.b16 %v732, %v731
    %v736 = vpack.c.b16 %v734, %v733
    %v740 = vsel %vm244, %v718, 0
    %742 = vmatpush.bf16.msra.mxu0 0
    %743 = vmatpush.bf16.msra.mxu0 0
    %744 = vmatpush.bf16.msra.mxu0 0
    %745 = vmatpush.bf16.msra.mxu0 0
    %746 = vmatpush.bf16.msra.mxu0 0
    %747 = vmatpush.bf16.msra.mxu0 0
    %748 = vmatpush.bf16.msra.mxu0 %v736
    %749 = vmatpush.bf16.msra.mxu0 %v735
    %750 = vmatmul.bf16.gmra.mxu0 %v740
    %v751 = vpop.f32.mrf.mxu0
    %v752 = vadd.f32 %v725, %v751
    %v753 = vpop.f32.mrf.mxu0
    %754 = vdwg.mxu0
    %v755 = vmul.f32 %v752, 0.5
    %v756 = vtanh.pop %v755
    %v757 = vmul.f32 %v756, 0.5
    %758 = vst [vmem:[#allocation11] sm:$0xff] %v757
    // Predicated region
    $region66: #{tpu_custom_call.1} parent=1 // pred_check
      _
    $region67: #{tpu_custom_call.1} parent=1 // pred_check_branch
      %760 = sbr.rel (0) target = $region69
    $region68: #{tpu_custom_call.1} parent=1 // pred_region
      %762 = vsyncadd [#allocation4], 0
      %s764 = sshll.u32 [#allocation11], 4
      %s765 = int_to_ptr.vmem [resolvable:$true] %s764
      %s766 = sshll.u32 %s11, 4
      %s767 = int_to_ptr.hbm [resolvable:$true] %s766
      %769 = dma.vmem_to_hbm [thread:$0]  %s765, 128, %s767, [#allocation4]
    $region69: #{tpu_custom_call.1} parent=1 // pred_fallthru
      _
    // Predicated region
    $region70: #{tpu_custom_call.1} parent=1 // pred_check
      _
    $region71: #{tpu_custom_call.1} parent=1 // pred_check_branch
      %771 = sbr.rel (0) target = $region73
    $region72: #{tpu_custom_call.1} parent=1 // pred_region
      %773 = dma.done [#allocation4], 128
    $region73: #{tpu_custom_call.1} parent=1 // pred_fallthru
      _
    %774 = vsyncpa [#allocation3], 1
    %775 = vsyncpa [#allocation6], 1
    %776 = vsyncpa [#allocation9], 1
    %777 = vsyncpa [#allocation4], 1

</llo_original>
